<compile_context>
chip_gen: v7x
topology: tpu7x:2x2x1
jax: 0.10.0
libtpu: 0.0.40
codegen_flags: <defaults>
</compile_context>

<pallas_src>
import jax
import jax.numpy as jnp
from jax.experimental import pallas as pl
from jax.experimental.pallas import tpu as pltpu


def _round_up(x, m):
    return ((x + m - 1) // m) * m


def _fit_tile(dim, pref, align):
    """Largest multiple of `align` that is <= pref and divides `dim` (falls back to dim)."""
    t = min(pref, dim)
    t = (t // align) * align
    while t >= align:
        if dim % t == 0:
            return t
        t -= align
    return dim


# ---------------------------------------------------------------------------
# Kernel 1: tiled linear  y = x @ W + b  (bf16 MXU operands, f32 accumulation)
# Used for (a) the hoisted all-timesteps input projection gates_x and
# (b) the hidden -> vocab projection.
# ---------------------------------------------------------------------------
def linear_kernel(x_ref, w_ref, b_ref, o_ref):
    x = x_ref[...].astype(w_ref.dtype)  # cast to bf16 in-kernel (no extra HBM pass)
    o_ref[...] = (
        jnp.dot(x, w_ref[...], preferred_element_type=jnp.float32) + b_ref[...]
    )


def linear_forward(x, w, b, *, tm_pref=256, tn_pref=512):
    """x: (M, K) f32, w: (K, N) bf16, b: (1, N) f32 -> (M, N) f32.
    M must be a multiple of 8 and N a multiple of 128 (caller pads)."""
    M, K = x.shape
    N = w.shape[1]
    tm = _fit_tile(M, tm_pref, 8)
    tn = _fit_tile(N, tn_pref, 128)
    grid = (M // tm, N // tn)
    return pl.pallas_call(
        linear_kernel,
        out_shape=jax.ShapeDtypeStruct((M, N), jnp.float32),
        grid_spec=pltpu.PrefetchScalarGridSpec(
            num_scalar_prefetch=0,
            grid=grid,
            in_specs=[
                pl.BlockSpec((tm, K), lambda i, j: (i, 0)),  # x row-tile (K resident)
                pl.BlockSpec((K, tn), lambda i, j: (0, j)),  # weight column-tile
                pl.BlockSpec((1, tn), lambda i, j: (0, j)),  # bias slice per N-tile
            ],
            out_specs=pl.BlockSpec((tm, tn), lambda i, j: (i, j)),
        ),
        compiler_params=pltpu.CompilerParams(
            # Independent output tiles -> shard across both TensorCores on v7x.
            dimension_semantics=("parallel", "parallel"),
            # Explicit limit sized with headroom for v7x's 64 MiB/TC VMEM; the
            # double-buffered (tm*K + K*tn + tm*tn) tiles here use far less.
            vmem_limit_bytes=48 * 1024 * 1024,
        ),
    )(x, w, b)


# ---------------------------------------------------------------------------
# Kernel 2: LSTM recurrence, single invocation with an internal time loop.
# gates_x (= x @ W_ih^T + b, all timesteps) is fully VMEM-resident.
# ---------------------------------------------------------------------------
def lstm_seq_kernel(gx_ref, whh_ref, hout_ref, h_sc, c_sc):
    T = gx_ref.shape[0]
    Hp = h_sc.shape[1]

    h_sc[...] = jnp.zeros_like(h_sc)  # init_hidden: h0 = c0 = 0
    c_sc[...] = jnp.zeros_like(c_sc)
    whh = whh_ref[...]                # hoisted once: resident bf16 (Hp, 4Hp)

    @pl.loop(0, T)
    def _(t):
        gates = gx_ref[t] + jnp.dot(
            h_sc[...].astype(whh.dtype), whh, preferred_element_type=jnp.float32
        )                                               # (Bp, 4Hp) f32
        # PyTorch gate order (i, f, g, o); slices are 128-lane aligned (Hp % 128 == 0).
        i = jax.nn.sigmoid(gates[:, 0 * Hp:1 * Hp])
        f = jax.nn.sigmoid(gates[:, 1 * Hp:2 * Hp])
        g = jnp.tanh(gates[:, 2 * Hp:3 * Hp])
        o = jax.nn.sigmoid(gates[:, 3 * Hp:4 * Hp])
        c = f * c_sc[...] + i * g
        h = o * jnp.tanh(c)
        c_sc[...] = c
        h_sc[...] = h
        hout_ref[t] = h


def lstm_forward(gates_x, w_hh):
    """gates_x: (T, Bp, 4Hp) f32, w_hh: (Hp, 4Hp) bf16 -> (T, Bp, Hp) f32."""
    T, Bp, G = gates_x.shape
    Hp = G // 4
    # TODO(synk): for very long T where gates_x exceeds VMEM, switch back to a T-grid
    # with pipeline_mode=pl.Buffered(3) on the gates_x BlockSpec.
    return pl.pallas_call(
        lstm_seq_kernel,
        out_shape=jax.ShapeDtypeStruct((T, Bp, Hp), jnp.float32),
        grid_spec=pltpu.PrefetchScalarGridSpec(
            num_scalar_prefetch=0,
            grid=(1,),
            in_specs=[
                pl.BlockSpec((T, Bp, G), lambda i: (0, 0, 0)),  # gates_x (resident)
                pl.BlockSpec((Hp, G), lambda i: (0, 0)),        # W_hh^T (resident)
            ],
            out_specs=pl.BlockSpec((T, Bp, Hp), lambda i: (0, 0, 0)),
            scratch_shapes=[
                pltpu.VMEM((Bp, Hp), jnp.float32),  # h carry
                pltpu.VMEM((Bp, Hp), jnp.float32),  # c carry
            ],
        ),
        compiler_params=pltpu.CompilerParams(
            dimension_semantics=("arbitrary",)),  # recurrence is sequential
    )(gates_x, w_hh)


# ---------------------------------------------------------------------------
# Parameter preparation: pad to TPU-friendly shapes, cast matmul weights to bf16.
# ---------------------------------------------------------------------------
def prepare_params(params, batch_size):
    H = params["w_hh_t"].shape[0]
    V = params["w_out_t"].shape[1]
    Hp = _round_up(H, 128)
    Vp = _round_up(V, 128)
    Bp = _round_up(batch_size, 8)

    def pad_gate_cols(w):
        # (rows, 4H) -> (rows, 4Hp): pad each (i,f,g,o) block independently so the
        # kernel's k*Hp:(k+1)*Hp slices keep PyTorch gate order; padded lanes are
        # mathematically inert (zero weights -> zero contribution).
        blocks = [jnp.pad(b, ((0, 0), (0, Hp - H))) for b in jnp.split(w, 4, axis=1)]
        return jnp.concatenate(blocks, axis=1)

    w_hh = jnp.pad(pad_gate_cols(params["w_hh_t"]), ((0, Hp - H), (0, 0)))
    return {
        "H": H, "V": V, "Hp": Hp, "Vp": Vp, "Bp": Bp,
        "embedding": params["embedding"],
        "w_ih_t": pad_gate_cols(params["w_ih_t"]).astype(jnp.bfloat16),       # (E, 4Hp)
        "w_hh_t": w_hh.astype(jnp.bfloat16),                                  # (Hp, 4Hp)
        "b_lstm": pad_gate_cols(params["b_lstm"]),                            # (1, 4Hp) f32
        "w_out_t": jnp.pad(params["w_out_t"],
                           ((0, Hp - H), (0, Vp - V))).astype(jnp.bfloat16),  # (Hp, Vp)
        "b_out": jnp.pad(params["b_out"], ((0, 0), (0, Vp - V))),             # (1, Vp) f32
    }


# ---------------------------------------------------------------------------
# DecoderRNN.forward
# ---------------------------------------------------------------------------
def decoder_forward(prep, features, captions):
    """features: (B, E) f32, captions: (B, Tcap) int32 -> logits (B, Tcap, V) f32."""
    B, E = features.shape
    T = captions.shape[1]  # 1 (image feature) + (Tcap - 1) shifted tokens
    H, V, Hp, Vp, Bp = prep["H"], prep["V"], prep["Hp"], prep["Vp"], prep["Bp"]

    # Embedding gather + concat is glue (no matmul hot path) -> plain JAX.
    embeds = jnp.take(prep["embedding"], captions[:, :-1], axis=0)     # (B, T-1, E)
    inputs = jnp.concatenate([features[:, None, :], embeds], axis=1)   # (B, T, E)
    x_tbe = jnp.transpose(inputs, (1, 0, 2))                           # (T, B, E)
    x_tbe = jnp.pad(x_tbe, ((0, 0), (0, Bp - B), (0, 0)))              # (T, Bp, E)

    # (1) Input projection + bias for ALL timesteps in one batched MXU matmul
    #     (hoisted off the sequential critical path; bias folded in here).
    gates_x = linear_forward(x_tbe.reshape(T * Bp, E),
                             prep["w_ih_t"], prep["b_lstm"])           # (T*Bp, 4Hp)
    gates_x = gates_x.reshape(T, Bp, 4 * Hp)

    # (2) Recurrence: single kernel invocation, internal time loop, state in VMEM.
    h_tbh = lstm_forward(gates_x, prep["w_hh_t"])                      # (T, Bp, Hp)

    # (3) Vocab projection directly on the time-major flat activations
    #     (no (B,T,H) transpose round-trip of the hidden states).
    logits = linear_forward(h_tbh.reshape(T * Bp, Hp),
                            prep["w_out_t"], prep["b_out"])            # (T*Bp, Vp)
    logits = logits.reshape(T, Bp, Vp)[:, :B, :V]                      # (T, B, V)
    return jnp.transpose(logits, (1, 0, 2))                            # (B, T, V)


# ---------------------------------------------------------------------------
# Pure-JAX f32 reference for correctness check
# ---------------------------------------------------------------------------
def decoder_forward_ref(params, features, captions):
    H = params["w_hh_t"].shape[0]
    embeds = jnp.take(params["embedding"], captions[:, :-1], axis=0)
    inputs = jnp.concatenate([features[:, None, :], embeds], axis=1)
    B, T, _ = inputs.shape
    h = jnp.zeros((B, H), jnp.float32)
    c = jnp.zeros((B, H), jnp.float32)
    outs = []
    for t in range(T):
        gates = inputs[:, t] @ params["w_ih_t"] + h @ params["w_hh_t"] + params["b_lstm"]
        i = jax.nn.sigmoid(gates[:, 0 * H:1 * H])
        f = jax.nn.sigmoid(gates[:, 1 * H:2 * H])
        g = jnp.tanh(gates[:, 2 * H:3 * H])
        o = jax.nn.sigmoid(gates[:, 3 * H:4 * H])
        c = f * c + i * g
        h = o * jnp.tanh(c)
        outs.append(h)
    lstm_out = jnp.stack(outs, axis=1)
    return lstm_out @ params["w_out_t"] + params["b_out"]


def init_params(key, embed_size, hidden_size, vocab_size):
    ks = jax.random.split(key, 7)
    s = 1.0 / jnp.sqrt(hidden_size)
    return {
        "embedding": jax.random.normal(ks[0], (vocab_size, embed_size), jnp.float32),
        # stored pre-transposed: W_ih^T (E, 4H), W_hh^T (H, 4H), W_out^T (H, V)
        "w_ih_t": jax.random.uniform(ks[1], (embed_size, 4 * hidden_size),
                                     jnp.float32, -s, s),
        "w_hh_t": jax.random.uniform(ks[2], (hidden_size, 4 * hidden_size),
                                     jnp.float32, -s, s),
        "b_lstm": (jax.random.uniform(ks[3], (1, 4 * hidden_size), jnp.float32, -s, s)
                   + jax.random.uniform(ks[4], (1, 4 * hidden_size), jnp.float32, -s, s)),
        "w_out_t": jax.random.uniform(ks[5], (hidden_size, vocab_size),
                                      jnp.float32, -s, s),
        "b_out": jax.random.uniform(ks[6], (1, vocab_size), jnp.float32, -s, s),
    }


if __name__ == "__main__":
    B, E, H, V, Tcap = 2, 16, 32, 40, 8

    key = jax.random.PRNGKey(0)
    kp, kf, kc = jax.random.split(key, 3)
    params = init_params(kp, E, H, V)
    features = jax.random.normal(kf, (B, E), jnp.float32)
    captions = jax.random.randint(kc, (B, Tcap), 0, V, jnp.int32)

    prep = prepare_params(params, B)
    out = decoder_forward(prep, features, captions)
    out = jax.block_until_ready(out)

    ref = decoder_forward_ref(params, features, captions)
    assert out.shape == (B, Tcap, V), out.shape
    # bf16 MXU operands (f32 accumulation) -> tolerance loosened vs the f32 reference.
    assert jnp.allclose(out, ref, atol=3e-2, rtol=3e-2), \
        float(jnp.max(jnp.abs(out - ref)))

    print("KERNEL_OK")
</pallas_src>

<mosaic_0001>
module attributes {stable_mosaic.version = 11 : i64} {
  func.func @linear_kernel(%arg0: i32, %arg1: i32, %arg2: memref<64x16xf32, #tpu.memory_space<vmem>>, %arg3: memref<16x512xbf16, #tpu.memory_space<vmem>>, %arg4: memref<1x512xf32, #tpu.memory_space<vmem>>, %arg5: memref<64x512xf32, #tpu.memory_space<vmem>>) attributes {dimension_semantics = [#tpu.dimension_semantics<parallel>, #tpu.dimension_semantics<parallel>], iteration_bounds = array<i64: 1, 1>, scalar_prefetch = 0 : i64, scratch_operands = 0 : i64, tpu.core_type = #tpu.core_type<tc>, window_params = [{transform_indices = @transform_0, window_bounds = array<i64: 64, 16>}, {transform_indices = @transform_1, window_bounds = array<i64: 16, 512>}, {transform_indices = @transform_2, window_bounds = array<i64: 1, 512>}, {transform_indices = @transform_3, window_bounds = array<i64: 64, 512>}]} {
    %c0 = arith.constant 0 : index
    %c0_0 = arith.constant 0 : index
    %0 = vector.load %arg2[%c0, %c0_0] : memref<64x16xf32, #tpu.memory_space<vmem>>, vector<64x16xf32>
    %1 = arith.truncf %0 : vector<64x16xf32> to vector<64x16xbf16>
    %c0_1 = arith.constant 0 : index
    %c0_2 = arith.constant 0 : index
    %2 = vector.load %arg3[%c0_1, %c0_2] : memref<16x512xbf16, #tpu.memory_space<vmem>>, vector<16x512xbf16>
    %cst = arith.constant dense<0.000000e+00> : vector<64x512xf32>
    %3 = tpu.matmul %1, %2, %cst {dimension_numbers = #tpu.dot_dimension_numbers<[1], [0], [0], [1], [0, 0, 1, 1], [], []>} : vector<64x16xbf16>, vector<16x512xbf16>, vector<64x512xf32> -> vector<64x512xf32>
    %c0_3 = arith.constant 0 : index
    %c0_4 = arith.constant 0 : index
    %4 = vector.load %arg4[%c0_3, %c0_4] : memref<1x512xf32, #tpu.memory_space<vmem>>, vector<1x512xf32>
    %5 = vector.broadcast %4 : vector<1x512xf32> to vector<64x512xf32>
    %6 = arith.addf %3, %5 : vector<64x512xf32>
    %c0_5 = arith.constant 0 : index
    %c0_6 = arith.constant 0 : index
    %7 = vector.load %arg5[%c0_5, %c0_6] : memref<64x512xf32, #tpu.memory_space<vmem>>, vector<64x512xf32>
    tpu.vector_store %arg5[%c0_5, %c0_6], %6 {strides = array<i32>} : memref<64x512xf32, #tpu.memory_space<vmem>>, vector<64x512xf32>,
    return
  }
  func.func @transform_0(%arg0: i32, %arg1: i32) -> (i32, i32) {
    %c0_i32 = arith.constant 0 : i32
    %c0_i32_0 = arith.constant 0 : i32
    return %arg0, %c0_i32 : i32, i32
  }
  func.func @transform_1(%arg0: i32, %arg1: i32) -> (i32, i32) {
    %c0_i32 = arith.constant 0 : i32
    %c0_i32_0 = arith.constant 0 : i32
    return %c0_i32, %arg1 : i32, i32
  }
  func.func @transform_2(%arg0: i32, %arg1: i32) -> (i32, i32) {
    %c0_i32 = arith.constant 0 : i32
    %c0_i32_0 = arith.constant 0 : i32
    return %c0_i32, %arg1 : i32, i32
  }
  func.func @transform_3(%arg0: i32, %arg1: i32) -> (i32, i32) {
    %c0_i32 = arith.constant 0 : i32
    return %arg0, %arg1 : i32, i32
  }
}

</mosaic_0001>

<llo_original>
// kernel: tpu_custom_call.1
$region0: #{tpu_custom_call.1}
  #allocation0 [shape = 'u32[]', space=smem, size = 0x4, offset = 0x4, fixed_abs, tag = 'smem constant byte address 0x4 - core index']
  #allocation1 [shape = 'u32[144,128]{1,0:T(1,128)}', space=vmem, size = 0x12000, scoped, tag = 'internal scratch']
  %s0 = inlined_call_operand.vmem [shape: f32[64,16], index: 0, kind: input, shape index: {}]
  %s1 = inlined_call_operand.vmem [shape: bf16[16,512], index: 1, kind: input, shape index: {}]
  %s2 = inlined_call_operand.vmem [shape: f32[1,512], index: 2, kind: input, shape index: {}]
  %s3 = inlined_call_operand.hbm [shape: f32[64,512], index: 3, kind: output, shape index: {}]
  %s4 = sld [smem:[#allocation0]]
  $region22: #{tpu_custom_call.1} parent=0
    _
  %s6 = ssub.s32 1, %s4
  %s7 = scalar_select 0, %s6, %s4
  $region1: #{tpu_custom_call.1} parent=0
    #allocation2 [shape = 'u8[131072]{0}', space=vmem, size = 0x20000, scoped, tag = 'output window, operand 0, single buffered']
    #allocation3 [shape = 's32[1]{0}', space=sflag, size = 0x4, scoped, tag = 'scoped memory for tpu_custom_call.1']
    %8 = vsyncpa [#allocation3], 0
    // Predicated region
    $region2: #{tpu_custom_call.1} parent=1 // pred_check
      _
    $region3: #{tpu_custom_call.1} parent=1 // pred_check_branch
      %10 = sbr.rel (0) target = $region5
    $region4: #{tpu_custom_call.1} parent=1 // pred_region
      _
    $region5: #{tpu_custom_call.1} parent=1 // pred_fallthru
      _
    // Predicated region
    $region6: #{tpu_custom_call.1} parent=1 // pred_check
      _
    $region7: #{tpu_custom_call.1} parent=1 // pred_check_branch
      %12 = sbr.rel (0) target = $region9
    $region8: #{tpu_custom_call.1} parent=1 // pred_region
      _
    $region9: #{tpu_custom_call.1} parent=1 // pred_fallthru
      _
    // Predicated region
    $region10: #{tpu_custom_call.1} parent=1 // pred_check
      _
    $region11: #{tpu_custom_call.1} parent=1 // pred_check_branch
      %14 = sbr.rel (0) target = $region13
    $region12: #{tpu_custom_call.1} parent=1 // pred_region
      _
    $region13: #{tpu_custom_call.1} parent=1 // pred_fallthru
      _
    %v16 = vld [vmem:[%s0] sm:$0xff]
    %v17 = vld [vmem:[%s0 + $0x8] sm:$0xff]
    %v18 = vld [vmem:[%s0 + $0x10] sm:$0xff]
    %v19 = vld [vmem:[%s0 + $0x18] sm:$0xff]
    %v20 = vld [vmem:[%s0 + $0x20] sm:$0xff]
    %v21 = vld [vmem:[%s0 + $0x28] sm:$0xff]
    %v22 = vld [vmem:[%s0 + $0x30] sm:$0xff]
    %v23 = vld [vmem:[%s0 + $0x38] sm:$0xff]
    %v24 = vpack.c.bf16 %v17, %v16
    %v25 = vpack.c.bf16 %v19, %v18
    %v26 = vpack.c.bf16 %v21, %v20
    %v27 = vpack.c.bf16 %v23, %v22
    %v28 = vld [vmem:[%s1] sm:$0xff]
    %v29 = vld [vmem:[%s1 + $0x8] sm:$0xff]
    %v30 = vld [vmem:[%s1 + $0x10] sm:$0xff]
    %v31 = vld [vmem:[%s1 + $0x18] sm:$0xff]
    %v32 = vld [vmem:[%s2] sm:$0xf]
    %v34 = vlaneseq
    %v35 = vshrl.u32 %v34, 7
    %v36 = vsub.s32 0, %v35
    %v37 = vrot.slane %v32, %v36
    %v38 = vlaneseq
    %v39 = vshrl.u32 %v38, 7
    %v40 = vsub.s32 1, %v39
    %v41 = vrot.slane %v32, %v40
    %v42 = vlaneseq
    %v43 = vshrl.u32 %v42, 7
    %v44 = vsub.s32 2, %v43
    %v45 = vrot.slane %v32, %v44
    %v46 = vlaneseq
    %v47 = vshrl.u32 %v46, 7
    %v48 = vsub.s32 3, %v47
    %v49 = vrot.slane %v32, %v48
    %v58 = vunpack.c.l.b16 %v28
    %v59 = vunpack.c.h.b16 %v28
    %v60 = vunpack.c.l.b16 %v29
    %v61 = vunpack.c.h.b16 %v29
    %v62 = vunpack.c.l.b16 %v30
    %v63 = vunpack.c.h.b16 %v30
    %v64 = vunpack.c.l.b16 %v31
    %v65 = vunpack.c.h.b16 %v31
    %v66 = vpack.c.b16 %v62, %v58
    %v67 = vpack.c.b16 %v63, %v59
    %v68 = vpack.c.b16 %v64, %v60
    %v69 = vpack.c.b16 %v65, %v61
    %vm74 = vcmask 130048
    %v76 = vsel %vm74, %v24, 0
    %v79 = vsel %vm74, %v25, 0
    %v82 = vsel %vm74, %v26, 0
    %v85 = vsel %vm74, %v27, 0
    %87 = vmatprep.subr.bf16.mxu0 %v67
    %88 = vmatpush1.bf16.msra.mxu0 %v66
    %89 = vmatprep.subr.bf16.mxu0 0
    %90 = vmatpush1.bf16.msra.mxu0 0
    %91 = vmatprep.subr.bf16.mxu0 0
    %92 = vmatpush1.bf16.msra.mxu0 0
    %93 = vmatprep.subr.bf16.mxu0 0
    %94 = vmatpush1.bf16.msra.mxu0 0
    %95 = vmatprep.subr.bf16.mxu0 0
    %96 = vmatpush1.bf16.msra.mxu0 0
    %97 = vmatprep.subr.bf16.mxu0 0
    %98 = vmatpush1.bf16.msra.mxu0 0
    %99 = vmatprep.subr.bf16.mxu0 0
    %100 = vmatpush1.bf16.msra.mxu0 0
    %101 = vmatprep.subr.bf16.mxu0 0
    %102 = vmatpush1.bf16.msra.mxu0 0
    %103 = vmatprep.subr.bf16.mxu0 0
    %104 = vmatpush1.bf16.msra.mxu0 0
    %105 = vmatprep.subr.bf16.mxu0 0
    %106 = vmatpush1.bf16.msra.mxu0 0
    %107 = vmatprep.subr.bf16.mxu0 0
    %108 = vmatpush1.bf16.msra.mxu0 0
    %109 = vmatprep.subr.bf16.mxu0 0
    %110 = vmatpush1.bf16.msra.mxu0 0
    %111 = vmatprep.subr.bf16.mxu0 0
    %112 = vmatpush1.bf16.msra.mxu0 0
    %113 = vmatprep.subr.bf16.mxu0 0
    %114 = vmatpush1.bf16.msra.mxu0 0
    %115 = vmatprep.subr.bf16.mxu0 0
    %116 = vmatpush1.bf16.msra.mxu0 0
    %117 = vmatprep.subr.bf16.mxu0 0
    %118 = vmatpush1.bf16.msra.mxu0 0
    %119 = vmatprep.mubr.bf16.mxu0 0
    %120 = vmatmul.mubr.bf16.gmra.mrb[0].mxu0 %v76
    %v121 = vpop.f32.mrb[0].mxu0
    %v122 = vadd.f32 %v37, %v121
    %v123 = vpop.f32.mrb[0].mxu0
    %v124 = vadd.f32 %v41, %v123
    %v125 = vpop.f32.mrb[0].mxu0
    %v126 = vadd.f32 %v37, %v125
    %v127 = vpop.f32.mrb[0].mxu0
    %v128 = vadd.f32 %v41, %v127
    %129 = vmatprep.mubr.bf16.mxu0 0
    %130 = vmatmul.mubr.bf16.gmra.mrb[0].mxu0 %v79
    %v131 = vpop.f32.mrb[0].mxu0
    %v132 = vadd.f32 %v37, %v131
    %v133 = vpop.f32.mrb[0].mxu0
    %v134 = vadd.f32 %v41, %v133
    %v135 = vpop.f32.mrb[0].mxu0
    %v136 = vadd.f32 %v37, %v135
    %v137 = vpop.f32.mrb[0].mxu0
    %v138 = vadd.f32 %v41, %v137
    %139 = vmatprep.mubr.bf16.mxu0 0
    %140 = vmatmul.mubr.bf16.gmra.mrb[0].mxu0 %v82
    %v141 = vpop.f32.mrb[0].mxu0
    %v142 = vadd.f32 %v37, %v141
    %v143 = vpop.f32.mrb[0].mxu0
    %v144 = vadd.f32 %v41, %v143
    %v145 = vpop.f32.mrb[0].mxu0
    %v146 = vadd.f32 %v37, %v145
    %v147 = vpop.f32.mrb[0].mxu0
    %v148 = vadd.f32 %v41, %v147
    %149 = vmatprep.mubr.bf16.mxu0 0
    %150 = vmatmul.mubr.bf16.gmra.mrb[0].mxu0 %v85
    %v151 = vpop.f32.mrb[0].mxu0
    %v152 = vadd.f32 %v37, %v151
    %v153 = vpop.f32.mrb[0].mxu0
    %v154 = vadd.f32 %v41, %v153
    %v155 = vpop.f32.mrb[0].mxu0
    %v156 = vadd.f32 %v37, %v155
    %v157 = vpop.f32.mrb[0].mxu0
    %v158 = vadd.f32 %v41, %v157
    %159 = vdwg.mxu0
    %160 = vmatprep.subr.bf16.mxu0 %v69
    %161 = vmatpush1.bf16.msra.mxu0 %v68
    %162 = vmatprep.subr.bf16.mxu0 0
    %163 = vmatpush1.bf16.msra.mxu0 0
    %164 = vmatprep.subr.bf16.mxu0 0
    %165 = vmatpush1.bf16.msra.mxu0 0
    %166 = vmatprep.subr.bf16.mxu0 0
    %167 = vmatpush1.bf16.msra.mxu0 0
    %168 = vmatprep.subr.bf16.mxu0 0
    %169 = vmatpush1.bf16.msra.mxu0 0
    %170 = vmatprep.subr.bf16.mxu0 0
    %171 = vmatpush1.bf16.msra.mxu0 0
    %172 = vmatprep.subr.bf16.mxu0 0
    %173 = vmatpush1.bf16.msra.mxu0 0
    %174 = vmatprep.subr.bf16.mxu0 0
    %175 = vmatpush1.bf16.msra.mxu0 0
    %176 = vmatprep.subr.bf16.mxu0 0
    %177 = vmatpush1.bf16.msra.mxu0 0
    %178 = vmatprep.subr.bf16.mxu0 0
    %179 = vmatpush1.bf16.msra.mxu0 0
    %180 = vmatprep.subr.bf16.mxu0 0
    %181 = vmatpush1.bf16.msra.mxu0 0
    %182 = vmatprep.subr.bf16.mxu0 0
    %183 = vmatpush1.bf16.msra.mxu0 0
    %184 = vmatprep.subr.bf16.mxu0 0
    %185 = vmatpush1.bf16.msra.mxu0 0
    %186 = vmatprep.subr.bf16.mxu0 0
    %187 = vmatpush1.bf16.msra.mxu0 0
    %188 = vmatprep.subr.bf16.mxu0 0
    %189 = vmatpush1.bf16.msra.mxu0 0
    %190 = vmatprep.subr.bf16.mxu0 0
    %191 = vmatpush1.bf16.msra.mxu0 0
    %192 = vmatprep.mubr.bf16.mxu0 0
    %193 = vmatmul.mubr.bf16.gmra.mrb[0].mxu0 %v76
    %v194 = vpop.f32.mrb[0].mxu0
    %v195 = vadd.f32 %v45, %v194
    %v196 = vpop.f32.mrb[0].mxu0
    %v197 = vadd.f32 %v49, %v196
    %v198 = vpop.f32.mrb[0].mxu0
    %v199 = vadd.f32 %v45, %v198
    %v200 = vpop.f32.mrb[0].mxu0
    %v201 = vadd.f32 %v49, %v200
    %202 = vmatprep.mubr.bf16.mxu0 0
    %203 = vmatmul.mubr.bf16.gmra.mrb[0].mxu0 %v79
    %v204 = vpop.f32.mrb[0].mxu0
    %v205 = vadd.f32 %v45, %v204
    %v206 = vpop.f32.mrb[0].mxu0
    %v207 = vadd.f32 %v49, %v206
    %v208 = vpop.f32.mrb[0].mxu0
    %v209 = vadd.f32 %v45, %v208
    %v210 = vpop.f32.mrb[0].mxu0
    %v211 = vadd.f32 %v49, %v210
    %212 = vmatprep.mubr.bf16.mxu0 0
    %213 = vmatmul.mubr.bf16.gmra.mrb[0].mxu0 %v82
    %v214 = vpop.f32.mrb[0].mxu0
    %v215 = vadd.f32 %v45, %v214
    %v216 = vpop.f32.mrb[0].mxu0
    %v217 = vadd.f32 %v49, %v216
    %v218 = vpop.f32.mrb[0].mxu0
    %v219 = vadd.f32 %v45, %v218
    %v220 = vpop.f32.mrb[0].mxu0
    %v221 = vadd.f32 %v49, %v220
    %222 = vmatprep.mubr.bf16.mxu0 0
    %223 = vmatmul.mubr.bf16.gmra.mrb[0].mxu0 %v85
    %v224 = vpop.f32.mrb[0].mxu0
    %v225 = vadd.f32 %v45, %v224
    %v226 = vpop.f32.mrb[0].mxu0
    %v227 = vadd.f32 %v49, %v226
    %v228 = vpop.f32.mrb[0].mxu0
    %v229 = vadd.f32 %v45, %v228
    %v230 = vpop.f32.mrb[0].mxu0
    %v231 = vadd.f32 %v49, %v230
    %232 = vdwg.mxu0
    %233 = vst [vmem:[#allocation2] sm:$0xff] %v122
    %234 = vst [vmem:[#allocation2 + $0x8] sm:$0xff] %v124
    %235 = vst [vmem:[#allocation2 + $0x10] sm:$0xff] %v195
    %236 = vst [vmem:[#allocation2 + $0x18] sm:$0xff] %v197
    %237 = vst [vmem:[#allocation2 + $0x20] sm:$0xff] %v126
    %238 = vst [vmem:[#allocation2 + $0x28] sm:$0xff] %v128
    %239 = vst [vmem:[#allocation2 + $0x30] sm:$0xff] %v199
    %240 = vst [vmem:[#allocation2 + $0x38] sm:$0xff] %v201
    %241 = vst [vmem:[#allocation2 + $0x40] sm:$0xff] %v132
    %242 = vst [vmem:[#allocation2 + $0x48] sm:$0xff] %v134
    %243 = vst [vmem:[#allocation2 + $0x50] sm:$0xff] %v205
    %244 = vst [vmem:[#allocation2 + $0x58] sm:$0xff] %v207
    %245 = vst [vmem:[#allocation2 + $0x60] sm:$0xff] %v136
    %246 = vst [vmem:[#allocation2 + $0x68] sm:$0xff] %v138
    %247 = vst [vmem:[#allocation2 + $0x70] sm:$0xff] %v209
    %248 = vst [vmem:[#allocation2 + $0x78] sm:$0xff] %v211
    %249 = vst [vmem:[#allocation2 + $0x80] sm:$0xff] %v142
    %250 = vst [vmem:[#allocation2 + $0x88] sm:$0xff] %v144
    %251 = vst [vmem:[#allocation2 + $0x90] sm:$0xff] %v215
    %252 = vst [vmem:[#allocation2 + $0x98] sm:$0xff] %v217
    %253 = vst [vmem:[#allocation2 + $0xa0] sm:$0xff] %v146
    %254 = vst [vmem:[#allocation2 + $0xa8] sm:$0xff] %v148
    %255 = vst [vmem:[#allocation2 + $0xb0] sm:$0xff] %v219
    %256 = vst [vmem:[#allocation2 + $0xb8] sm:$0xff] %v221
    %257 = vst [vmem:[#allocation2 + $0xc0] sm:$0xff] %v152
    %258 = vst [vmem:[#allocation2 + $0xc8] sm:$0xff] %v154
    %259 = vst [vmem:[#allocation2 + $0xd0] sm:$0xff] %v225
    %260 = vst [vmem:[#allocation2 + $0xd8] sm:$0xff] %v227
    %261 = vst [vmem:[#allocation2 + $0xe0] sm:$0xff] %v156
    %262 = vst [vmem:[#allocation2 + $0xe8] sm:$0xff] %v158
    %263 = vst [vmem:[#allocation2 + $0xf0] sm:$0xff] %v229
    %264 = vst [vmem:[#allocation2 + $0xf8] sm:$0xff] %v231
    // Predicated region
    $region14: #{tpu_custom_call.1} parent=1 // pred_check
      _
    $region15: #{tpu_custom_call.1} parent=1 // pred_check_branch
      %266 = sbr.rel (0) target = $region17
    $region16: #{tpu_custom_call.1} parent=1 // pred_region
      %s268 = ssub.s32 4096, 4096
      %269 = vsyncadd [#allocation3], %s268
      %s270 = sshll.u32 [#allocation2], 4
      %s271 = int_to_ptr.vmem [resolvable:$true] %s270
      %276 = dma.vmem_to_hbm [thread:$0]  %s271, 4096, %s3, [#allocation3], 512, 512, 32
    $region17: #{tpu_custom_call.1} parent=1 // pred_fallthru
      _
    // Predicated region
    $region18: #{tpu_custom_call.1} parent=1 // pred_check
      _
    $region19: #{tpu_custom_call.1} parent=1 // pred_check_branch
      %278 = sbr.rel (0) target = $region21
    $region20: #{tpu_custom_call.1} parent=1 // pred_region
      %279 = dma.done [#allocation3], 4096
    $region21: #{tpu_custom_call.1} parent=1 // pred_fallthru
      _
    %280 = vsyncpa [#allocation3], 1

</llo_original>
